<compile_context>
chip_gen: v6e
topology: v6e:2x2x1
jax: 0.10.0
libtpu: 0.0.40
codegen_flags: <defaults>
</compile_context>

<pallas_src>
import jax
import jax.numpy as jnp
from jax.experimental import pallas as pl
from jax.experimental.pallas import tpu as pltpu  # noqa: F401  (TPU backend)


def relu_conv1x1_kernel(x_ref, w_ref, o_ref):
    # x_ref: (Cin, HW) f32, w_ref: (Cout, Cin) bf16 (or f32), o_ref: (Cout, HW) f32
    # ReLU in f32 on the VPU; dot accumulates in f32 on the MXU.
    x = jnp.maximum(x_ref[...], 0.0)
    w = w_ref[...]
    o_ref[...] = jnp.dot(
        w, x, preferred_element_type=jnp.float32
    ).astype(o_ref.dtype)


def relu_conv2d_1x1(x_nchw, w_oihw):
    """x_nchw: (1, Cin, H, W); w_oihw: (Cout, Cin, 1, 1) any float dtype.

    Returns (1, Cout, H, W) in x's dtype.
    """
    N, Cin, H, W = x_nchw.shape
    Cout = w_oihw.shape[0]
    assert N == 1, "zero-transpose layout assumes batch size 1 (as in module M)"
    hw = H * W

    # Free reshapes only (no transposes, no extra HBM traffic):
    x2d = x_nchw.reshape(Cin, hw)        # (960, 49)
    w2d = w_oihw.reshape(Cout, Cin)      # (128, 960), dtype preserved (bf16 here)

    x_bytes = Cin * hw * jnp.dtype(x_nchw.dtype).itemsize
    w_bytes = Cout * Cin * jnp.dtype(w_oihw.dtype).itemsize
    o_bytes = Cout * hw * jnp.dtype(x_nchw.dtype).itemsize
    cost = pl.CostEstimate(
        flops=2 * hw * Cin * Cout,
        transcendentals=0,
        bytes_accessed=x_bytes + w_bytes + o_bytes,
    )

    out2d = pl.pallas_call(
        relu_conv1x1_kernel,
        out_shape=jax.ShapeDtypeStruct((Cout, hw), x_nchw.dtype),
        # Tiny problem: full-extent blocks, single grid point.
        in_specs=[
            pl.BlockSpec((Cin, hw), lambda: (0, 0)),
            pl.BlockSpec((Cout, Cin), lambda: (0, 0)),
        ],
        out_specs=pl.BlockSpec((Cout, hw), lambda: (0, 0)),
        cost_estimate=cost,
    )(x2d, w2d)

    # (Cout, HW) -> (1, Cout, H, W): free reshape.
    return out2d.reshape(N, Cout, H, W)


if __name__ == "__main__":
    key = jax.random.PRNGKey(0)
    kx, kw = jax.random.split(key)

    # Shapes implied by the module's forward.
    N, Cin, H, W = 1, 960, 7, 7
    Cout = 128

    x = jax.random.normal(kx, (N, Cin, H, W), dtype=jnp.float32)
    # Deterministic weight init (kaiming-ish scale for a 1x1 conv), f32 "master".
    w_f32 = jax.random.normal(kw, (Cout, Cin, 1, 1), dtype=jnp.float32) * (1.0 / (Cin ** 0.5))
    # One-time parameter-load conversion: weight stored/fed as bf16 (halves the
    # dominant HBM transfer). This happens once, not per call.
    w_bf16 = w_f32.astype(jnp.bfloat16)

    out = relu_conv2d_1x1(x, w_bf16)
    out = jax.block_until_ready(out)
    assert out.shape == (N, Cout, H, W)

    x_relu = jnp.maximum(x, 0.0)

    # 1) Kernel-correctness check against the exact math the kernel performs
    #    (bf16-stored weight, f32 compute): tight tolerance.
    ref_bf16w = jnp.einsum(
        "nchw,oc->nohw", x_relu, w_bf16.astype(jnp.float32).reshape(Cout, Cin),
        preferred_element_type=jnp.float32,
    )
    assert jnp.allclose(out, ref_bf16w, atol=1e-3, rtol=1e-3)

    # 2) Module-semantics check against the original f32 conv: the only error
    #    source is the intentional bf16 weight storage (~1e-3 absolute).
    ref_f32 = jnp.einsum(
        "nchw,oc->nohw", x_relu, w_f32.reshape(Cout, Cin),
        preferred_element_type=jnp.float32,
    )
    assert jnp.allclose(out, ref_f32, atol=1e-2, rtol=1e-2)

    print("KERNEL_OK")
</pallas_src>

<mosaic_0001>
module attributes {stable_mosaic.version = 11 : i64} {
  func.func @relu_conv1x1_kernel(%arg0: memref<960x49xf32, #tpu.memory_space<vmem>>, %arg1: memref<128x960xbf16, #tpu.memory_space<vmem>>, %arg2: memref<128x49xf32, #tpu.memory_space<vmem>>) attributes {dimension_semantics = [], scalar_prefetch = 0 : i64, scratch_operands = 0 : i64, tpu.core_type = #tpu.core_type<tc>} {
    %c0 = arith.constant 0 : index
    %c0_0 = arith.constant 0 : index
    %0 = vector.load %arg0[%c0, %c0_0] : memref<960x49xf32, #tpu.memory_space<vmem>>, vector<960x49xf32>
    %cst = arith.constant 0.000000e+00 : f32
    %1 = vector.broadcast %cst : f32 to vector<960x49xf32>
    %2 = arith.maximumf %0, %1 : vector<960x49xf32>
    %c0_1 = arith.constant 0 : index
    %c0_2 = arith.constant 0 : index
    %3 = vector.load %arg1[%c0_1, %c0_2] : memref<128x960xbf16, #tpu.memory_space<vmem>>, vector<128x960xbf16>
    %cst_3 = arith.constant dense<0.000000e+00> : vector<128x49xf32>
    %4 = tpu.matmul %3, %2, %cst_3 {dimension_numbers = #tpu.dot_dimension_numbers<[1], [0], [0], [1], [0, 0, 1, 1], [], []>} : vector<128x960xbf16>, vector<960x49xf32>, vector<128x49xf32> -> vector<128x49xf32>
    %c0_4 = arith.constant 0 : index
    %c0_5 = arith.constant 0 : index
    %5 = vector.load %arg2[%c0_4, %c0_5] : memref<128x49xf32, #tpu.memory_space<vmem>>, vector<128x49xf32>
    tpu.vector_store %arg2[%c0_4, %c0_5], %4 {strides = array<i32>} : memref<128x49xf32, #tpu.memory_space<vmem>>, vector<128x49xf32>,
    return
  }
}

</mosaic_0001>

<llo_original>
// kernel: tpu_custom_call.1
$region0: #{tpu_custom_call.1}
  #allocation0 [shape = 'u32[]', space=smem, size = 0x4, offset = 0x4, fixed_abs, tag = 'smem constant byte address 0x4 - core index']
  #allocation1 [shape = 'u32[144,128]{1,0:T(1,128)}', space=vmem, size = 0x12000, scoped, tag = 'internal scratch']
  %s0 = inlined_call_operand.vmem [shape: f32[960,49], index: 0, kind: input, shape index: {}]
  %s1 = inlined_call_operand.vmem [shape: bf16[128,960], index: 1, kind: input, shape index: {}]
  %s2 = inlined_call_operand.vmem [shape: f32[128,49], index: 2, kind: output, shape index: {}]
  %s3 = sld [smem:[#allocation0]]
  $region18: #{tpu_custom_call.1} parent=0
    _
  %s5 = ssub.s32 1, %s3
  %s6 = scalar_select 0, %s5, %s3
  // Predicated region
  $region2: #{tpu_custom_call.1} parent=0 // pred_check
    _
  $region3: #{tpu_custom_call.1} parent=0 // pred_check_branch
    %8 = sbr.rel (0) target = $region5
  $region4: #{tpu_custom_call.1} parent=0 // pred_region
    _
  $region5: #{tpu_custom_call.1} parent=0 // pred_fallthru
    _
  // Predicated region
  $region6: #{tpu_custom_call.1} parent=0 // pred_check
    _
  $region7: #{tpu_custom_call.1} parent=0 // pred_check_branch
    %10 = sbr.rel (0) target = $region9
  $region8: #{tpu_custom_call.1} parent=0 // pred_region
    _
  $region9: #{tpu_custom_call.1} parent=0 // pred_fallthru
    _
  %v11 = vld [vmem:[%s0] sm:$0xff]
  %v12 = vld [vmem:[%s0 + $0x8] sm:$0xff]
  %v13 = vld [vmem:[%s0 + $0x10] sm:$0xff]
  %v14 = vld [vmem:[%s0 + $0x18] sm:$0xff]
  %v15 = vld [vmem:[%s0 + $0x20] sm:$0xff]
  %v16 = vld [vmem:[%s0 + $0x28] sm:$0xff]
  %v17 = vld [vmem:[%s0 + $0x30] sm:$0xff]
  %v18 = vld [vmem:[%s0 + $0x38] sm:$0xff]
  %v19 = vld [vmem:[%s0 + $0x40] sm:$0xff]
  %v20 = vld [vmem:[%s0 + $0x48] sm:$0xff]
  %v21 = vld [vmem:[%s0 + $0x50] sm:$0xff]
  %v22 = vld [vmem:[%s0 + $0x58] sm:$0xff]
  %v23 = vld [vmem:[%s0 + $0x60] sm:$0xff]
  %v24 = vld [vmem:[%s0 + $0x68] sm:$0xff]
  %v25 = vld [vmem:[%s0 + $0x70] sm:$0xff]
  %v26 = vld [vmem:[%s0 + $0x78] sm:$0xff]
  %v27 = vld [vmem:[%s0 + $0x80] sm:$0xff]
  %v28 = vld [vmem:[%s0 + $0x88] sm:$0xff]
  %v29 = vld [vmem:[%s0 + $0x90] sm:$0xff]
  %v30 = vld [vmem:[%s0 + $0x98] sm:$0xff]
  %v31 = vld [vmem:[%s0 + $0xa0] sm:$0xff]
  %v32 = vld [vmem:[%s0 + $0xa8] sm:$0xff]
  %v33 = vld [vmem:[%s0 + $0xb0] sm:$0xff]
  %v34 = vld [vmem:[%s0 + $0xb8] sm:$0xff]
  %v35 = vld [vmem:[%s0 + $0xc0] sm:$0xff]
  %v36 = vld [vmem:[%s0 + $0xc8] sm:$0xff]
  %v37 = vld [vmem:[%s0 + $0xd0] sm:$0xff]
  %v38 = vld [vmem:[%s0 + $0xd8] sm:$0xff]
  %v39 = vld [vmem:[%s0 + $0xe0] sm:$0xff]
  %v40 = vld [vmem:[%s0 + $0xe8] sm:$0xff]
  %v41 = vld [vmem:[%s0 + $0xf0] sm:$0xff]
  %v42 = vld [vmem:[%s0 + $0xf8] sm:$0xff]
  %v43 = vld [vmem:[%s0 + $0x100] sm:$0xff]
  %v44 = vld [vmem:[%s0 + $0x108] sm:$0xff]
  %v45 = vld [vmem:[%s0 + $0x110] sm:$0xff]
  %v46 = vld [vmem:[%s0 + $0x118] sm:$0xff]
  %v47 = vld [vmem:[%s0 + $0x120] sm:$0xff]
  %v48 = vld [vmem:[%s0 + $0x128] sm:$0xff]
  %v49 = vld [vmem:[%s0 + $0x130] sm:$0xff]
  %v50 = vld [vmem:[%s0 + $0x138] sm:$0xff]
  %v51 = vld [vmem:[%s0 + $0x140] sm:$0xff]
  %v52 = vld [vmem:[%s0 + $0x148] sm:$0xff]
  %v53 = vld [vmem:[%s0 + $0x150] sm:$0xff]
  %v54 = vld [vmem:[%s0 + $0x158] sm:$0xff]
  %v55 = vld [vmem:[%s0 + $0x160] sm:$0xff]
  %v56 = vld [vmem:[%s0 + $0x168] sm:$0xff]
  %v57 = vld [vmem:[%s0 + $0x170] sm:$0xff]
  %v58 = vld [vmem:[%s0 + $0x178] sm:$0xff]
  %v59 = vld [vmem:[%s0 + $0x180] sm:$0xff]
  %v60 = vld [vmem:[%s0 + $0x188] sm:$0xff]
  %v61 = vld [vmem:[%s0 + $0x190] sm:$0xff]
  %v62 = vld [vmem:[%s0 + $0x198] sm:$0xff]
  %v63 = vld [vmem:[%s0 + $0x1a0] sm:$0xff]
  %v64 = vld [vmem:[%s0 + $0x1a8] sm:$0xff]
  %v65 = vld [vmem:[%s0 + $0x1b0] sm:$0xff]
  %v66 = vld [vmem:[%s0 + $0x1b8] sm:$0xff]
  %v67 = vld [vmem:[%s0 + $0x1c0] sm:$0xff]
  %v68 = vld [vmem:[%s0 + $0x1c8] sm:$0xff]
  %v69 = vld [vmem:[%s0 + $0x1d0] sm:$0xff]
  %v70 = vld [vmem:[%s0 + $0x1d8] sm:$0xff]
  %v71 = vld [vmem:[%s0 + $0x1e0] sm:$0xff]
  %v72 = vld [vmem:[%s0 + $0x1e8] sm:$0xff]
  %v73 = vld [vmem:[%s0 + $0x1f0] sm:$0xff]
  %v74 = vld [vmem:[%s0 + $0x1f8] sm:$0xff]
  %v75 = vld [vmem:[%s0 + $0x200] sm:$0xff]
  %v76 = vld [vmem:[%s0 + $0x208] sm:$0xff]
  %v77 = vld [vmem:[%s0 + $0x210] sm:$0xff]
  %v78 = vld [vmem:[%s0 + $0x218] sm:$0xff]
  %v79 = vld [vmem:[%s0 + $0x220] sm:$0xff]
  %v80 = vld [vmem:[%s0 + $0x228] sm:$0xff]
  %v81 = vld [vmem:[%s0 + $0x230] sm:$0xff]
  %v82 = vld [vmem:[%s0 + $0x238] sm:$0xff]
  %v83 = vld [vmem:[%s0 + $0x240] sm:$0xff]
  %v84 = vld [vmem:[%s0 + $0x248] sm:$0xff]
  %v85 = vld [vmem:[%s0 + $0x250] sm:$0xff]
  %v86 = vld [vmem:[%s0 + $0x258] sm:$0xff]
  %v87 = vld [vmem:[%s0 + $0x260] sm:$0xff]
  %v88 = vld [vmem:[%s0 + $0x268] sm:$0xff]
  %v89 = vld [vmem:[%s0 + $0x270] sm:$0xff]
  %v90 = vld [vmem:[%s0 + $0x278] sm:$0xff]
  %v91 = vld [vmem:[%s0 + $0x280] sm:$0xff]
  %v92 = vld [vmem:[%s0 + $0x288] sm:$0xff]
  %v93 = vld [vmem:[%s0 + $0x290] sm:$0xff]
  %v94 = vld [vmem:[%s0 + $0x298] sm:$0xff]
  %v95 = vld [vmem:[%s0 + $0x2a0] sm:$0xff]
  %v96 = vld [vmem:[%s0 + $0x2a8] sm:$0xff]
  %v97 = vld [vmem:[%s0 + $0x2b0] sm:$0xff]
  %v98 = vld [vmem:[%s0 + $0x2b8] sm:$0xff]
  %v99 = vld [vmem:[%s0 + $0x2c0] sm:$0xff]
  %v100 = vld [vmem:[%s0 + $0x2c8] sm:$0xff]
  %v101 = vld [vmem:[%s0 + $0x2d0] sm:$0xff]
  %v102 = vld [vmem:[%s0 + $0x2d8] sm:$0xff]
  %v103 = vld [vmem:[%s0 + $0x2e0] sm:$0xff]
  %v104 = vld [vmem:[%s0 + $0x2e8] sm:$0xff]
  %v105 = vld [vmem:[%s0 + $0x2f0] sm:$0xff]
  %v106 = vld [vmem:[%s0 + $0x2f8] sm:$0xff]
  %v107 = vld [vmem:[%s0 + $0x300] sm:$0xff]
  %v108 = vld [vmem:[%s0 + $0x308] sm:$0xff]
  %v109 = vld [vmem:[%s0 + $0x310] sm:$0xff]
  %v110 = vld [vmem:[%s0 + $0x318] sm:$0xff]
  %v111 = vld [vmem:[%s0 + $0x320] sm:$0xff]
  %v112 = vld [vmem:[%s0 + $0x328] sm:$0xff]
  %v113 = vld [vmem:[%s0 + $0x330] sm:$0xff]
  %v114 = vld [vmem:[%s0 + $0x338] sm:$0xff]
  %v115 = vld [vmem:[%s0 + $0x340] sm:$0xff]
  %v116 = vld [vmem:[%s0 + $0x348] sm:$0xff]
  %v117 = vld [vmem:[%s0 + $0x350] sm:$0xff]
  %v118 = vld [vmem:[%s0 + $0x358] sm:$0xff]
  %v119 = vld [vmem:[%s0 + $0x360] sm:$0xff]
  %v120 = vld [vmem:[%s0 + $0x368] sm:$0xff]
  %v121 = vld [vmem:[%s0 + $0x370] sm:$0xff]
  %v122 = vld [vmem:[%s0 + $0x378] sm:$0xff]
  %v123 = vld [vmem:[%s0 + $0x380] sm:$0xff]
  %v124 = vld [vmem:[%s0 + $0x388] sm:$0xff]
  %v125 = vld [vmem:[%s0 + $0x390] sm:$0xff]
  %v126 = vld [vmem:[%s0 + $0x398] sm:$0xff]
  %v127 = vld [vmem:[%s0 + $0x3a0] sm:$0xff]
  %v128 = vld [vmem:[%s0 + $0x3a8] sm:$0xff]
  %v129 = vld [vmem:[%s0 + $0x3b0] sm:$0xff]
  %v130 = vld [vmem:[%s0 + $0x3b8] sm:$0xff]
  %v131 = vmax.f32 %v11, 0.0
  %v132 = vmax.f32 %v12, 0.0
  %v133 = vmax.f32 %v13, 0.0
  %v134 = vmax.f32 %v14, 0.0
  %v135 = vmax.f32 %v15, 0.0
  %v136 = vmax.f32 %v16, 0.0
  %v137 = vmax.f32 %v17, 0.0
  %v138 = vmax.f32 %v18, 0.0
  %v139 = vmax.f32 %v19, 0.0
  %v140 = vmax.f32 %v20, 0.0
  %v141 = vmax.f32 %v21, 0.0
  %v142 = vmax.f32 %v22, 0.0
  %v143 = vmax.f32 %v23, 0.0
  %v144 = vmax.f32 %v24, 0.0
  %v145 = vmax.f32 %v25, 0.0
  %v146 = vmax.f32 %v26, 0.0
  %v147 = vmax.f32 %v27, 0.0
  %v148 = vmax.f32 %v28, 0.0
  %v149 = vmax.f32 %v29, 0.0
  %v150 = vmax.f32 %v30, 0.0
  %v151 = vmax.f32 %v31, 0.0
  %v152 = vmax.f32 %v32, 0.0
  %v153 = vmax.f32 %v33, 0.0
  %v154 = vmax.f32 %v34, 0.0
  %v155 = vmax.f32 %v35, 0.0
  %v156 = vmax.f32 %v36, 0.0
  %v157 = vmax.f32 %v37, 0.0
  %v158 = vmax.f32 %v38, 0.0
  %v159 = vmax.f32 %v39, 0.0
  %v160 = vmax.f32 %v40, 0.0
  %v161 = vmax.f32 %v41, 0.0
  %v162 = vmax.f32 %v42, 0.0
  %v163 = vmax.f32 %v43, 0.0
  %v164 = vmax.f32 %v44, 0.0
  %v165 = vmax.f32 %v45, 0.0
  %v166 = vmax.f32 %v46, 0.0
  %v167 = vmax.f32 %v47, 0.0
  %v168 = vmax.f32 %v48, 0.0
  %v169 = vmax.f32 %v49, 0.0
  %v170 = vmax.f32 %v50, 0.0
  %v171 = vmax.f32 %v51, 0.0
  %v172 = vmax.f32 %v52, 0.0
  %v173 = vmax.f32 %v53, 0.0
  %v174 = vmax.f32 %v54, 0.0
  %v175 = vmax.f32 %v55, 0.0
  %v176 = vmax.f32 %v56, 0.0
  %v177 = vmax.f32 %v57, 0.0
  %v178 = vmax.f32 %v58, 0.0
  %v179 = vmax.f32 %v59, 0.0
  %v180 = vmax.f32 %v60, 0.0
  %v181 = vmax.f32 %v61, 0.0
  %v182 = vmax.f32 %v62, 0.0
  %v183 = vmax.f32 %v63, 0.0
  %v184 = vmax.f32 %v64, 0.0
  %v185 = vmax.f32 %v65, 0.0
  %v186 = vmax.f32 %v66, 0.0
  %v187 = vmax.f32 %v67, 0.0
  %v188 = vmax.f32 %v68, 0.0
  %v189 = vmax.f32 %v69, 0.0
  %v190 = vmax.f32 %v70, 0.0
  %v191 = vmax.f32 %v71, 0.0
  %v192 = vmax.f32 %v72, 0.0
  %v193 = vmax.f32 %v73, 0.0
  %v194 = vmax.f32 %v74, 0.0
  %v195 = vmax.f32 %v75, 0.0
  %v196 = vmax.f32 %v76, 0.0
  %v197 = vmax.f32 %v77, 0.0
  %v198 = vmax.f32 %v78, 0.0
  %v199 = vmax.f32 %v79, 0.0
  %v200 = vmax.f32 %v80, 0.0
  %v201 = vmax.f32 %v81, 0.0
  %v202 = vmax.f32 %v82, 0.0
  %v203 = vmax.f32 %v83, 0.0
  %v204 = vmax.f32 %v84, 0.0
  %v205 = vmax.f32 %v85, 0.0
  %v206 = vmax.f32 %v86, 0.0
  %v207 = vmax.f32 %v87, 0.0
  %v208 = vmax.f32 %v88, 0.0
  %v209 = vmax.f32 %v89, 0.0
  %v210 = vmax.f32 %v90, 0.0
  %v211 = vmax.f32 %v91, 0.0
  %v212 = vmax.f32 %v92, 0.0
  %v213 = vmax.f32 %v93, 0.0
  %v214 = vmax.f32 %v94, 0.0
  %v215 = vmax.f32 %v95, 0.0
  %v216 = vmax.f32 %v96, 0.0
  %v217 = vmax.f32 %v97, 0.0
  %v218 = vmax.f32 %v98, 0.0
  %v219 = vmax.f32 %v99, 0.0
  %v220 = vmax.f32 %v100, 0.0
  %v221 = vmax.f32 %v101, 0.0
  %v222 = vmax.f32 %v102, 0.0
  %v223 = vmax.f32 %v103, 0.0
  %v224 = vmax.f32 %v104, 0.0
  %v225 = vmax.f32 %v105, 0.0
  %v226 = vmax.f32 %v106, 0.0
  %v227 = vmax.f32 %v107, 0.0
  %v228 = vmax.f32 %v108, 0.0
  %v229 = vmax.f32 %v109, 0.0
  %v230 = vmax.f32 %v110, 0.0
  %v231 = vmax.f32 %v111, 0.0
  %v232 = vmax.f32 %v112, 0.0
  %v233 = vmax.f32 %v113, 0.0
  %v234 = vmax.f32 %v114, 0.0
  %v235 = vmax.f32 %v115, 0.0
  %v236 = vmax.f32 %v116, 0.0
  %v237 = vmax.f32 %v117, 0.0
  %v238 = vmax.f32 %v118, 0.0
  %v239 = vmax.f32 %v119, 0.0
  %v240 = vmax.f32 %v120, 0.0
  %v241 = vmax.f32 %v121, 0.0
  %v242 = vmax.f32 %v122, 0.0
  %v243 = vmax.f32 %v123, 0.0
  %v244 = vmax.f32 %v124, 0.0
  %v245 = vmax.f32 %v125, 0.0
  %v246 = vmax.f32 %v126, 0.0
  %v247 = vmax.f32 %v127, 0.0
  %v248 = vmax.f32 %v128, 0.0
  %v249 = vmax.f32 %v129, 0.0
  %v250 = vmax.f32 %v130, 0.0
  %v251 = vld [vmem:[%s1] sm:$0xff]
  %v252 = vld [vmem:[%s1 + $0x8] sm:$0xff]
  %v253 = vld [vmem:[%s1 + $0x10] sm:$0xff]
  %v254 = vld [vmem:[%s1 + $0x18] sm:$0xff]
  %v255 = vld [vmem:[%s1 + $0x20] sm:$0xff]
  %v256 = vld [vmem:[%s1 + $0x28] sm:$0xff]
  %v257 = vld [vmem:[%s1 + $0x30] sm:$0xff]
  %v258 = vld [vmem:[%s1 + $0x38] sm:$0xff]
  %v259 = vld [vmem:[%s1 + $0x40] sm:$0xff]
  %v260 = vld [vmem:[%s1 + $0x48] sm:$0xff]
  %v261 = vld [vmem:[%s1 + $0x50] sm:$0xff]
  %v262 = vld [vmem:[%s1 + $0x58] sm:$0xff]
  %v263 = vld [vmem:[%s1 + $0x60] sm:$0xff]
  %v264 = vld [vmem:[%s1 + $0x68] sm:$0xff]
  %v265 = vld [vmem:[%s1 + $0x70] sm:$0xff]
  %v266 = vld [vmem:[%s1 + $0x78] sm:$0xff]
  %v267 = vld [vmem:[%s1 + $0x80] sm:$0xff]
  %v268 = vld [vmem:[%s1 + $0x88] sm:$0xff]
  %v269 = vld [vmem:[%s1 + $0x90] sm:$0xff]
  %v270 = vld [vmem:[%s1 + $0x98] sm:$0xff]
  %v271 = vld [vmem:[%s1 + $0xa0] sm:$0xff]
  %v272 = vld [vmem:[%s1 + $0xa8] sm:$0xff]
  %v273 = vld [vmem:[%s1 + $0xb0] sm:$0xff]
  %v274 = vld [vmem:[%s1 + $0xb8] sm:$0xff]
  %v275 = vld [vmem:[%s1 + $0xc0] sm:$0xff]
  %v276 = vld [vmem:[%s1 + $0xc8] sm:$0xff]
  %v277 = vld [vmem:[%s1 + $0xd0] sm:$0xff]
  %v278 = vld [vmem:[%s1 + $0xd8] sm:$0xff]
  %v279 = vld [vmem:[%s1 + $0xe0] sm:$0xff]
  %v280 = vld [vmem:[%s1 + $0xe8] sm:$0xff]
  %v281 = vld [vmem:[%s1 + $0xf0] sm:$0xff]
  %v282 = vld [vmem:[%s1 + $0xf8] sm:$0xff]
  %v283 = vld [vmem:[%s1 + $0x100] sm:$0xff]
  %v284 = vld [vmem:[%s1 + $0x108] sm:$0xff]
  %v285 = vld [vmem:[%s1 + $0x110] sm:$0xff]
  %v286 = vld [vmem:[%s1 + $0x118] sm:$0xff]
  %v287 = vld [vmem:[%s1 + $0x120] sm:$0xff]
  %v288 = vld [vmem:[%s1 + $0x128] sm:$0xff]
  %v289 = vld [vmem:[%s1 + $0x130] sm:$0xff]
  %v290 = vld [vmem:[%s1 + $0x138] sm:$0xff]
  %v291 = vld [vmem:[%s1 + $0x140] sm:$0xff]
  %v292 = vld [vmem:[%s1 + $0x148] sm:$0xff]
  %v293 = vld [vmem:[%s1 + $0x150] sm:$0xff]
  %v294 = vld [vmem:[%s1 + $0x158] sm:$0xff]
  %v295 = vld [vmem:[%s1 + $0x160] sm:$0xff]
  %v296 = vld [vmem:[%s1 + $0x168] sm:$0xff]
  %v297 = vld [vmem:[%s1 + $0x170] sm:$0xff]
  %v298 = vld [vmem:[%s1 + $0x178] sm:$0xff]
  %v299 = vld [vmem:[%s1 + $0x180] sm:$0xff]
  %v300 = vld [vmem:[%s1 + $0x188] sm:$0xff]
  %v301 = vld [vmem:[%s1 + $0x190] sm:$0xff]
  %v302 = vld [vmem:[%s1 + $0x198] sm:$0xff]
  %v303 = vld [vmem:[%s1 + $0x1a0] sm:$0xff]
  %v304 = vld [vmem:[%s1 + $0x1a8] sm:$0xff]
  %v305 = vld [vmem:[%s1 + $0x1b0] sm:$0xff]
  %v306 = vld [vmem:[%s1 + $0x1b8] sm:$0xff]
  %v307 = vld [vmem:[%s1 + $0x1c0] sm:$0xff]
  %v308 = vld [vmem:[%s1 + $0x1c8] sm:$0xff]
  %v309 = vld [vmem:[%s1 + $0x1d0] sm:$0xff]
  %v310 = vld [vmem:[%s1 + $0x1d8] sm:$0xff]
  %v311 = vld [vmem:[%s1 + $0x1e0] sm:$0xff]
  %v312 = vld [vmem:[%s1 + $0x1e8] sm:$0xff]
  %v313 = vld [vmem:[%s1 + $0x1f0] sm:$0xff]
  %v314 = vld [vmem:[%s1 + $0x1f8] sm:$0xff]
  %v379 = vunpack.c.l.b16 %v251
  %v380 = vunpack.c.h.b16 %v251
  %v381 = vunpack.c.l.b16 %v252
  %v382 = vunpack.c.h.b16 %v252
  %v383 = vunpack.c.l.b16 %v253
  %v384 = vunpack.c.h.b16 %v253
  %v385 = vunpack.c.l.b16 %v254
  %v386 = vunpack.c.h.b16 %v254
  %v387 = vunpack.c.l.b16 %v255
  %v388 = vunpack.c.h.b16 %v255
  %v389 = vunpack.c.l.b16 %v256
  %v390 = vunpack.c.h.b16 %v256
  %v391 = vunpack.c.l.b16 %v257
  %v392 = vunpack.c.h.b16 %v257
  %v393 = vunpack.c.l.b16 %v258
  %v394 = vunpack.c.h.b16 %v258
  %v395 = vunpack.c.l.b16 %v259
  %v396 = vunpack.c.h.b16 %v259
  %v397 = vunpack.c.l.b16 %v260
  %v398 = vunpack.c.h.b16 %v260
  %v399 = vunpack.c.l.b16 %v261
  %v400 = vunpack.c.h.b16 %v261
  %v401 = vunpack.c.l.b16 %v262
  %v402 = vunpack.c.h.b16 %v262
  %v403 = vunpack.c.l.b16 %v263
  %v404 = vunpack.c.h.b16 %v263
  %v405 = vunpack.c.l.b16 %v264
  %v406 = vunpack.c.h.b16 %v264
  %v407 = vunpack.c.l.b16 %v265
  %v408 = vunpack.c.h.b16 %v265
  %v409 = vunpack.c.l.b16 %v266
  %v410 = vunpack.c.h.b16 %v266
  %v411 = vunpack.c.l.b16 %v267
  %v412 = vunpack.c.h.b16 %v267
  %v413 = vunpack.c.l.b16 %v268
  %v414 = vunpack.c.h.b16 %v268
  %v415 = vunpack.c.l.b16 %v269
  %v416 = vunpack.c.h.b16 %v269
  %v417 = vunpack.c.l.b16 %v270
  %v418 = vunpack.c.h.b16 %v270
  %v419 = vunpack.c.l.b16 %v271
  %v420 = vunpack.c.h.b16 %v271
  %v421 = vunpack.c.l.b16 %v272
  %v422 = vunpack.c.h.b16 %v272
  %v423 = vunpack.c.l.b16 %v273
  %v424 = vunpack.c.h.b16 %v273
  %v425 = vunpack.c.l.b16 %v274
  %v426 = vunpack.c.h.b16 %v274
  %v427 = vunpack.c.l.b16 %v275
  %v428 = vunpack.c.h.b16 %v275
  %v429 = vunpack.c.l.b16 %v276
  %v430 = vunpack.c.h.b16 %v276
  %v431 = vunpack.c.l.b16 %v277
  %v432 = vunpack.c.h.b16 %v277
  %v433 = vunpack.c.l.b16 %v278
  %v434 = vunpack.c.h.b16 %v278
  %v435 = vunpack.c.l.b16 %v279
  %v436 = vunpack.c.h.b16 %v279
  %v437 = vunpack.c.l.b16 %v280
  %v438 = vunpack.c.h.b16 %v280
  %v439 = vunpack.c.l.b16 %v281
  %v440 = vunpack.c.h.b16 %v281
  %v441 = vunpack.c.l.b16 %v282
  %v442 = vunpack.c.h.b16 %v282
  %v443 = vunpack.c.l.b16 %v283
  %v444 = vunpack.c.h.b16 %v283
  %v445 = vunpack.c.l.b16 %v284
  %v446 = vunpack.c.h.b16 %v284
  %v447 = vunpack.c.l.b16 %v285
  %v448 = vunpack.c.h.b16 %v285
  %v449 = vunpack.c.l.b16 %v286
  %v450 = vunpack.c.h.b16 %v286
  %v451 = vunpack.c.l.b16 %v287
  %v452 = vunpack.c.h.b16 %v287
  %v453 = vunpack.c.l.b16 %v288
  %v454 = vunpack.c.h.b16 %v288
  %v455 = vunpack.c.l.b16 %v289
  %v456 = vunpack.c.h.b16 %v289
  %v457 = vunpack.c.l.b16 %v290
  %v458 = vunpack.c.h.b16 %v290
  %v459 = vunpack.c.l.b16 %v291
  %v460 = vunpack.c.h.b16 %v291
  %v461 = vunpack.c.l.b16 %v292
  %v462 = vunpack.c.h.b16 %v292
  %v463 = vunpack.c.l.b16 %v293
  %v464 = vunpack.c.h.b16 %v293
  %v465 = vunpack.c.l.b16 %v294
  %v466 = vunpack.c.h.b16 %v294
  %v467 = vunpack.c.l.b16 %v295
  %v468 = vunpack.c.h.b16 %v295
  %v469 = vunpack.c.l.b16 %v296
  %v470 = vunpack.c.h.b16 %v296
  %v471 = vunpack.c.l.b16 %v297
  %v472 = vunpack.c.h.b16 %v297
  %v473 = vunpack.c.l.b16 %v298
  %v474 = vunpack.c.h.b16 %v298
  %v475 = vunpack.c.l.b16 %v299
  %v476 = vunpack.c.h.b16 %v299
  %v477 = vunpack.c.l.b16 %v300
  %v478 = vunpack.c.h.b16 %v300
  %v479 = vunpack.c.l.b16 %v301
  %v480 = vunpack.c.h.b16 %v301
  %v481 = vunpack.c.l.b16 %v302
  %v482 = vunpack.c.h.b16 %v302
  %v483 = vunpack.c.l.b16 %v303
  %v484 = vunpack.c.h.b16 %v303
  %v485 = vunpack.c.l.b16 %v304
  %v486 = vunpack.c.h.b16 %v304
  %v487 = vunpack.c.l.b16 %v305
  %v488 = vunpack.c.h.b16 %v305
  %v489 = vunpack.c.l.b16 %v306
  %v490 = vunpack.c.h.b16 %v306
  %v491 = vunpack.c.l.b16 %v307
  %v492 = vunpack.c.h.b16 %v307
  %v493 = vunpack.c.l.b16 %v308
  %v494 = vunpack.c.h.b16 %v308
  %v495 = vunpack.c.l.b16 %v309
  %v496 = vunpack.c.h.b16 %v309
  %v497 = vunpack.c.l.b16 %v310
  %v498 = vunpack.c.h.b16 %v310
  %v499 = vunpack.c.l.b16 %v311
  %v500 = vunpack.c.h.b16 %v311
  %v501 = vunpack.c.l.b16 %v312
  %v502 = vunpack.c.h.b16 %v312
  %v503 = vunpack.c.l.b16 %v313
  %v504 = vunpack.c.h.b16 %v313
  %v505 = vunpack.c.l.b16 %v314
  %v506 = vunpack.c.h.b16 %v314
  %v507 = vpack.c.b16 %v387, %v379
  %v508 = vpack.c.b16 %v388, %v380
  %v509 = vpack.c.b16 %v389, %v381
  %v510 = vpack.c.b16 %v390, %v382
  %v511 = vpack.c.b16 %v391, %v383
  %v512 = vpack.c.b16 %v392, %v384
  %v513 = vpack.c.b16 %v393, %v385
  %v514 = vpack.c.b16 %v394, %v386
  %v515 = vpack.c.b16 %v403, %v395
  %v516 = vpack.c.b16 %v404, %v396
  %v517 = vpack.c.b16 %v405, %v397
  %v518 = vpack.c.b16 %v406, %v398
  %v519 = vpack.c.b16 %v407, %v399
  %v520 = vpack.c.b16 %v408, %v400
  %v521 = vpack.c.b16 %v409, %v401
  %v522 = vpack.c.b16 %v410, %v402
  %v523 = vpack.c.b16 %v419, %v411
  %v524 = vpack.c.b16 %v420, %v412
  %v525 = vpack.c.b16 %v421, %v413
  %v526 = vpack.c.b16 %v422, %v414
  %v527 = vpack.c.b16 %v423, %v415
  %v528 = vpack.c.b16 %v424, %v416
  %v529 = vpack.c.b16 %v425, %v417
  %v530 = vpack.c.b16 %v426, %v418
  %v531 = vpack.c.b16 %v435, %v427
  %v532 = vpack.c.b16 %v436, %v428
  %v533 = vpack.c.b16 %v437, %v429
  %v534 = vpack.c.b16 %v438, %v430
  %v535 = vpack.c.b16 %v439, %v431
  %v536 = vpack.c.b16 %v440, %v432
  %v537 = vpack.c.b16 %v441, %v433
  %v538 = vpack.c.b16 %v442, %v434
  %v539 = vpack.c.b16 %v451, %v443
  %v540 = vpack.c.b16 %v452, %v444
  %v541 = vpack.c.b16 %v453, %v445
  %v542 = vpack.c.b16 %v454, %v446
  %v543 = vpack.c.b16 %v455, %v447
  %v544 = vpack.c.b16 %v456, %v448
  %v545 = vpack.c.b16 %v457, %v449
  %v546 = vpack.c.b16 %v458, %v450
  %v547 = vpack.c.b16 %v467, %v459
  %v548 = vpack.c.b16 %v468, %v460
  %v549 = vpack.c.b16 %v469, %v461
  %v550 = vpack.c.b16 %v470, %v462
  %v551 = vpack.c.b16 %v471, %v463
  %v552 = vpack.c.b16 %v472, %v464
  %v553 = vpack.c.b16 %v473, %v465
  %v554 = vpack.c.b16 %v474, %v466
  %v555 = vpack.c.b16 %v483, %v475
  %v556 = vpack.c.b16 %v484, %v476
  %v557 = vpack.c.b16 %v485, %v477
  %v558 = vpack.c.b16 %v486, %v478
  %v559 = vpack.c.b16 %v487, %v479
  %v560 = vpack.c.b16 %v488, %v480
  %v561 = vpack.c.b16 %v489, %v481
  %v562 = vpack.c.b16 %v490, %v482
  %v563 = vpack.c.b16 %v499, %v491
  %v564 = vpack.c.b16 %v500, %v492
  %v565 = vpack.c.b16 %v501, %v493
  %v566 = vpack.c.b16 %v502, %v494
  %v567 = vpack.c.b16 %v503, %v495
  %v568 = vpack.c.b16 %v504, %v496
  %v569 = vpack.c.b16 %v505, %v497
  %v570 = vpack.c.b16 %v506, %v498
  %vm627 = vcmask 523264
  %v629 = vsel %vm627, %v514, 0
  %v632 = vsel %vm627, %v522, 0
  %v635 = vsel %vm627, %v530, 0
  %v638 = vsel %vm627, %v538, 0
  %v641 = vsel %vm627, %v546, 0
  %v644 = vsel %vm627, %v554, 0
  %v647 = vsel %vm627, %v562, 0
  %v650 = vsel %vm627, %v570, 0
  %652 = vmatprep.subr.mxu0 0.0
  %653 = vmatpush1.msra.mxu0 %v146
  %654 = vmatprep.subr.mxu0 0.0
  %655 = vmatpush1.msra.mxu0 %v145
  %656 = vmatprep.subr.mxu0 0.0
  %657 = vmatpush1.msra.mxu0 %v144
  %658 = vmatprep.subr.mxu0 0.0
  %659 = vmatpush1.msra.mxu0 %v143
  %660 = vmatprep.subr.mxu0 0.0
  %661 = vmatpush1.msra.mxu0 %v142
  %662 = vmatprep.subr.mxu0 0.0
  %663 = vmatpush1.msra.mxu0 %v141
  %664 = vmatprep.subr.mxu0 0.0
  %665 = vmatpush1.msra.mxu0 %v140
  %666 = vmatprep.subr.mxu0 0.0
  %667 = vmatpush1.msra.mxu0 %v139
  %668 = vmatprep.subr.mxu0 0.0
  %669 = vmatpush1.msra.mxu0 %v138
  %670 = vmatprep.subr.mxu0 0.0
  %671 = vmatpush1.msra.mxu0 %v137
  %672 = vmatprep.subr.mxu0 0.0
  %673 = vmatpush1.msra.mxu0 %v136
  %674 = vmatprep.subr.mxu0 0.0
  %675 = vmatpush1.msra.mxu0 %v135
  %676 = vmatprep.subr.mxu0 0.0
  %677 = vmatpush1.msra.mxu0 %v134
  %678 = vmatprep.subr.mxu0 0.0
  %679 = vmatpush1.msra.mxu0 %v133
  %680 = vmatprep.subr.mxu0 0.0
  %681 = vmatpush1.msra.mxu0 %v132
  %682 = vmatprep.subr.mxu0 0.0
  %683 = vmatpush1.msra.mxu0 %v131
  %684 = vmatprep.subr.mxu0 0.0
  %685 = vmatpush2.msra.mxu0 %v162
  %686 = vmatprep.subr.mxu0 0.0
  %687 = vmatpush2.msra.mxu0 %v161
  %688 = vmatprep.subr.mxu0 0.0
  %689 = vmatpush2.msra.mxu0 %v160
  %690 = vmatprep.subr.mxu0 0.0
  %691 = vmatpush2.msra.mxu0 %v159
  %692 = vmatprep.subr.mxu0 0.0
  %693 = vmatpush2.msra.mxu0 %v158
  %694 = vmatprep.subr.mxu0 0.0
  %695 = vmatpush2.msra.mxu0 %v157
  %696 = vmatprep.subr.mxu0 0.0
  %697 = vmatpush2.msra.mxu0 %v156
  %698 = vmatprep.subr.mxu0 0.0
  %699 = vmatpush2.msra.mxu0 %v155
  %700 = vmatprep.subr.mxu0 0.0
  %701 = vmatpush2.msra.mxu0 %v154
  %702 = vmatprep.subr.mxu0 0.0
  %703 = vmatpush2.msra.mxu0 %v153
  %704 = vmatprep.subr.mxu0 0.0
  %705 = vmatpush2.msra.mxu0 %v152
  %706 = vmatprep.subr.mxu0 0.0
  %707 = vmatpush2.msra.mxu0 %v151
  %708 = vmatprep.subr.mxu0 0.0
  %709 = vmatpush2.msra.mxu0 %v150
  %710 = vmatprep.subr.mxu0 0.0
  %711 = vmatpush2.msra.mxu0 %v149
  %712 = vmatprep.subr.mxu0 0.0
  %713 = vmatpush2.msra.mxu0 %v148
  %714 = vmatprep.subr.mxu0 0.0
  %715 = vmatpush2.msra.mxu0 %v147
  %716 = vmatprep.mubr.bf16.mxu0 %v508
  %717 = vmatmul.mubr.bf16.gmra.mxu0 %v507
  %v718 = vpop.f32.mrf.mxu0
  %v719 = vadd.f32 0.0, %v718
  %v720 = vpop.f32.mrf.mxu0
  %v721 = vpop.f32.mrf.mxu0
  %v722 = vadd.f32 0.0, %v721
  %v723 = vpop.f32.mrf.mxu0
  %724 = vmatprep.mubr.bf16.mxu0 %v516
  %725 = vmatmul.mubr.bf16.gmra.mxu0 %v515
  %v726 = vpop.f32.mrf.mxu0
  %v727 = vadd.f32 0.0, %v726
  %v728 = vpop.f32.mrf.mxu0
  %v729 = vpop.f32.mrf.mxu0
  %v730 = vadd.f32 0.0, %v729
  %v731 = vpop.f32.mrf.mxu0
  %732 = vmatprep.mubr.bf16.mxu0 %v524
  %733 = vmatmul.mubr.bf16.gmra.mxu0 %v523
  %v734 = vpop.f32.mrf.mxu0
  %v735 = vadd.f32 0.0, %v734
  %v736 = vpop.f32.mrf.mxu0
  %v737 = vpop.f32.mrf.mxu0
  %v738 = vadd.f32 0.0, %v737
  %v739 = vpop.f32.mrf.mxu0
  %740 = vmatprep.mubr.bf16.mxu0 %v532
  %741 = vmatmul.mubr.bf16.gmra.mxu0 %v531
  %v742 = vpop.f32.mrf.mxu0
  %v743 = vadd.f32 0.0, %v742
  %v744 = vpop.f32.mrf.mxu0
  %v745 = vpop.f32.mrf.mxu0
  %v746 = vadd.f32 0.0, %v745
  %v747 = vpop.f32.mrf.mxu0
  %748 = vmatprep.mubr.bf16.mxu0 %v540
  %749 = vmatmul.mubr.bf16.gmra.mxu0 %v539
  %v750 = vpop.f32.mrf.mxu0
  %v751 = vadd.f32 0.0, %v750
  %v752 = vpop.f32.mrf.mxu0
  %v753 = vpop.f32.mrf.mxu0
  %v754 = vadd.f32 0.0, %v753
  %v755 = vpop.f32.mrf.mxu0
  %756 = vmatprep.mubr.bf16.mxu0 %v548
  %757 = vmatmul.mubr.bf16.gmra.mxu0 %v547
  %v758 = vpop.f32.mrf.mxu0
  %v759 = vadd.f32 0.0, %v758
  %v760 = vpop.f32.mrf.mxu0
  %v761 = vpop.f32.mrf.mxu0
  %v762 = vadd.f32 0.0, %v761
  %v763 = vpop.f32.mrf.mxu0
  %764 = vmatprep.mubr.bf16.mxu0 %v556
  %765 = vmatmul.mubr.bf16.gmra.mxu0 %v555
  %v766 = vpop.f32.mrf.mxu0
  %v767 = vadd.f32 0.0, %v766
  %v768 = vpop.f32.mrf.mxu0
  %v769 = vpop.f32.mrf.mxu0
  %v770 = vadd.f32 0.0, %v769
  %v771 = vpop.f32.mrf.mxu0
  %772 = vmatprep.mubr.bf16.mxu0 %v564
  %773 = vmatmul.mubr.bf16.gmra.mxu0 %v563
  %v774 = vpop.f32.mrf.mxu0
  %v775 = vadd.f32 0.0, %v774
  %v776 = vpop.f32.mrf.mxu0
  %v777 = vpop.f32.mrf.mxu0
  %v778 = vadd.f32 0.0, %v777
  %v779 = vpop.f32.mrf.mxu0
  %780 = vdwg.mxu0
  %781 = vmatprep.subr.mxu0 0.0
  %782 = vmatpush1.msra.mxu0 %v178
  %783 = vmatprep.subr.mxu0 0.0
  %784 = vmatpush1.msra.mxu0 %v177
  %785 = vmatprep.subr.mxu0 0.0
  %786 = vmatpush1.msra.mxu0 %v176
  %787 = vmatprep.subr.mxu0 0.0
  %788 = vmatpush1.msra.mxu0 %v175
  %789 = vmatprep.subr.mxu0 0.0
  %790 = vmatpush1.msra.mxu0 %v174
  %791 = vmatprep.subr.mxu0 0.0
  %792 = vmatpush1.msra.mxu0 %v173
  %793 = vmatprep.subr.mxu0 0.0
  %794 = vmatpush1.msra.mxu0 %v172
  %795 = vmatprep.subr.mxu0 0.0
  %796 = vmatpush1.msra.mxu0 %v171
  %797 = vmatprep.subr.mxu0 0.0
  %798 = vmatpush1.msra.mxu0 %v170
  %799 = vmatprep.subr.mxu0 0.0
  %800 = vmatpush1.msra.mxu0 %v169
  %801 = vmatprep.subr.mxu0 0.0
  %802 = vmatpush1.msra.mxu0 %v168
  %803 = vmatprep.subr.mxu0 0.0
  %804 = vmatpush1.msra.mxu0 %v167
  %805 = vmatprep.subr.mxu0 0.0
  %806 = vmatpush1.msra.mxu0 %v166
  %807 = vmatprep.subr.mxu0 0.0
  %808 = vmatpush1.msra.mxu0 %v165
  %809 = vmatprep.subr.mxu0 0.0
  %810 = vmatpush1.msra.mxu0 %v164
  %811 = vmatprep.subr.mxu0 0.0
  %812 = vmatpush1.msra.mxu0 %v163
  %813 = vmatprep.subr.mxu0 0.0
  %814 = vmatpush2.msra.mxu0 %v194
  %815 = vmatprep.subr.mxu0 0.0
  %816 = vmatpush2.msra.mxu0 %v193
  %817 = vmatprep.subr.mxu0 0.0
  %818 = vmatpush2.msra.mxu0 %v192
  %819 = vmatprep.subr.mxu0 0.0
  %820 = vmatpush2.msra.mxu0 %v191
  %821 = vmatprep.subr.mxu0 0.0
  %822 = vmatpush2.msra.mxu0 %v190
  %823 = vmatprep.subr.mxu0 0.0
  %824 = vmatpush2.msra.mxu0 %v189
  %825 = vmatprep.subr.mxu0 0.0
  %826 = vmatpush2.msra.mxu0 %v188
  %827 = vmatprep.subr.mxu0 0.0
  %828 = vmatpush2.msra.mxu0 %v187
  %829 = vmatprep.subr.mxu0 0.0
  %830 = vmatpush2.msra.mxu0 %v186
  %831 = vmatprep.subr.mxu0 0.0
  %832 = vmatpush2.msra.mxu0 %v185
  %833 = vmatprep.subr.mxu0 0.0
  %834 = vmatpush2.msra.mxu0 %v184
  %835 = vmatprep.subr.mxu0 0.0
  %836 = vmatpush2.msra.mxu0 %v183
  %837 = vmatprep.subr.mxu0 0.0
  %838 = vmatpush2.msra.mxu0 %v182
  %839 = vmatprep.subr.mxu0 0.0
  %840 = vmatpush2.msra.mxu0 %v181
  %841 = vmatprep.subr.mxu0 0.0
  %842 = vmatpush2.msra.mxu0 %v180
  %843 = vmatprep.subr.mxu0 0.0
  %844 = vmatpush2.msra.mxu0 %v179
  %845 = vmatprep.mubr.bf16.mxu0 %v510
  %846 = vmatmul.mubr.bf16.gmra.mxu0 %v509
  %v847 = vpop.f32.mrf.mxu0
  %v848 = vadd.f32 %v719, %v847
  %v849 = vpop.f32.mrf.mxu0
  %v850 = vpop.f32.mrf.mxu0
  %v851 = vadd.f32 %v722, %v850
  %v852 = vpop.f32.mrf.mxu0
  %853 = vmatprep.mubr.bf16.mxu0 %v518
  %854 = vmatmul.mubr.bf16.gmra.mxu0 %v517
  %v855 = vpop.f32.mrf.mxu0
  %v856 = vadd.f32 %v727, %v855
  %v857 = vpop.f32.mrf.mxu0
  %v858 = vpop.f32.mrf.mxu0
  %v859 = vadd.f32 %v730, %v858
  %v860 = vpop.f32.mrf.mxu0
  %861 = vmatprep.mubr.bf16.mxu0 %v526
  %862 = vmatmul.mubr.bf16.gmra.mxu0 %v525
  %v863 = vpop.f32.mrf.mxu0
  %v864 = vadd.f32 %v735, %v863
  %v865 = vpop.f32.mrf.mxu0
  %v866 = vpop.f32.mrf.mxu0
  %v867 = vadd.f32 %v738, %v866
  %v868 = vpop.f32.mrf.mxu0
  %869 = vmatprep.mubr.bf16.mxu0 %v534
  %870 = vmatmul.mubr.bf16.gmra.mxu0 %v533
  %v871 = vpop.f32.mrf.mxu0
  %v872 = vadd.f32 %v743, %v871
  %v873 = vpop.f32.mrf.mxu0
  %v874 = vpop.f32.mrf.mxu0
  %v875 = vadd.f32 %v746, %v874
  %v876 = vpop.f32.mrf.mxu0
  %877 = vmatprep.mubr.bf16.mxu0 %v542
  %878 = vmatmul.mubr.bf16.gmra.mxu0 %v541
  %v879 = vpop.f32.mrf.mxu0
  %v880 = vadd.f32 %v751, %v879
  %v881 = vpop.f32.mrf.mxu0
  %v882 = vpop.f32.mrf.mxu0
  %v883 = vadd.f32 %v754, %v882
  %v884 = vpop.f32.mrf.mxu0
  %885 = vmatprep.mubr.bf16.mxu0 %v550
  %886 = vmatmul.mubr.bf16.gmra.mxu0 %v549
  %v887 = vpop.f32.mrf.mxu0
  %v888 = vadd.f32 %v759, %v887
  %v889 = vpop.f32.mrf.mxu0
  %v890 = vpop.f32.mrf.mxu0
  %v891 = vadd.f32 %v762, %v890
  %v892 = vpop.f32.mrf.mxu0
  %893 = vmatprep.mubr.bf16.mxu0 %v558
  %894 = vmatmul.mubr.bf16.gmra.mxu0 %v557
  %v895 = vpop.f32.mrf.mxu0
  %v896 = vadd.f32 %v767, %v895
  %v897 = vpop.f32.mrf.mxu0
  %v898 = vpop.f32.mrf.mxu0
  %v899 = vadd.f32 %v770, %v898
  %v900 = vpop.f32.mrf.mxu0
  %901 = vmatprep.mubr.bf16.mxu0 %v566
  %902 = vmatmul.mubr.bf16.gmra.mxu0 %v565
  %v903 = vpop.f32.mrf.mxu0
  %v904 = vadd.f32 %v775, %v903
  %v905 = vpop.f32.mrf.mxu0
  %v906 = vpop.f32.mrf.mxu0
  %v907 = vadd.f32 %v778, %v906
  %v908 = vpop.f32.mrf.mxu0
  %909 = vdwg.mxu0
  %910 = vmatprep.subr.mxu0 0.0
  %911 = vmatpush1.msra.mxu0 %v210
  %912 = vmatprep.subr.mxu0 0.0
  %913 = vmatpush1.msra.mxu0 %v209
  %914 = vmatprep.subr.mxu0 0.0
  %915 = vmatpush1.msra.mxu0 %v208
  %916 = vmatprep.subr.mxu0 0.0
  %917 = vmatpush1.msra.mxu0 %v207
  %918 = vmatprep.subr.mxu0 0.0
  %919 = vmatpush1.msra.mxu0 %v206
  %920 = vmatprep.subr.mxu0 0.0
  %921 = vmatpush1.msra.mxu0 %v205
  %922 = vmatprep.subr.mxu0 0.0
  %923 = vmatpush1.msra.mxu0 %v204
  %924 = vmatprep.subr.mxu0 0.0
  %925 = vmatpush1.msra.mxu0 %v203
  %926 = vmatprep.subr.mxu0 0.0
  %927 = vmatpush1.msra.mxu0 %v202
  %928 = vmatprep.subr.mxu0 0.0
  %929 = vmatpush1.msra.mxu0 %v201
  %930 = vmatprep.subr.mxu0 0.0
  %931 = vmatpush1.msra.mxu0 %v200
  %932 = vmatprep.subr.mxu0 0.0
  %933 = vmatpush1.msra.mxu0 %v199
  %934 = vmatprep.subr.mxu0 0.0
  %935 = vmatpush1.msra.mxu0 %v198
  %936 = vmatprep.subr.mxu0 0.0
  %937 = vmatpush1.msra.mxu0 %v197
  %938 = vmatprep.subr.mxu0 0.0
  %939 = vmatpush1.msra.mxu0 %v196
  %940 = vmatprep.subr.mxu0 0.0
  %941 = vmatpush1.msra.mxu0 %v195
  %942 = vmatprep.subr.mxu0 0.0
  %943 = vmatpush2.msra.mxu0 %v226
  %944 = vmatprep.subr.mxu0 0.0
  %945 = vmatpush2.msra.mxu0 %v225
  %946 = vmatprep.subr.mxu0 0.0
  %947 = vmatpush2.msra.mxu0 %v224
  %948 = vmatprep.subr.mxu0 0.0
  %949 = vmatpush2.msra.mxu0 %v223
  %950 = vmatprep.subr.mxu0 0.0
  %951 = vmatpush2.msra.mxu0 %v222
  %952 = vmatprep.subr.mxu0 0.0
  %953 = vmatpush2.msra.mxu0 %v221
  %954 = vmatprep.subr.mxu0 0.0
  %955 = vmatpush2.msra.mxu0 %v220
  %956 = vmatprep.subr.mxu0 0.0
  %957 = vmatpush2.msra.mxu0 %v219
  %958 = vmatprep.subr.mxu0 0.0
  %959 = vmatpush2.msra.mxu0 %v218
  %960 = vmatprep.subr.mxu0 0.0
  %961 = vmatpush2.msra.mxu0 %v217
  %962 = vmatprep.subr.mxu0 0.0
  %963 = vmatpush2.msra.mxu0 %v216
  %964 = vmatprep.subr.mxu0 0.0
  %965 = vmatpush2.msra.mxu0 %v215
  %966 = vmatprep.subr.mxu0 0.0
  %967 = vmatpush2.msra.mxu0 %v214
  %968 = vmatprep.subr.mxu0 0.0
  %969 = vmatpush2.msra.mxu0 %v213
  %970 = vmatprep.subr.mxu0 0.0
  %971 = vmatpush2.msra.mxu0 %v212
  %972 = vmatprep.subr.mxu0 0.0
  %973 = vmatpush2.msra.mxu0 %v211
  %974 = vmatprep.mubr.bf16.mxu0 %v512
  %975 = vmatmul.mubr.bf16.gmra.mxu0 %v511
  %v976 = vpop.f32.mrf.mxu0
  %v977 = vadd.f32 %v848, %v976
  %v978 = vpop.f32.mrf.mxu0
  %v979 = vpop.f32.mrf.mxu0
  %v980 = vadd.f32 %v851, %v979
  %v981 = vpop.f32.mrf.mxu0
  %982 = vmatprep.mubr.bf16.mxu0 %v520
  %983 = vmatmul.mubr.bf16.gmra.mxu0 %v519
  %v984 = vpop.f32.mrf.mxu0
  %v985 = vadd.f32 %v856, %v984
  %v986 = vpop.f32.mrf.mxu0
  %v987 = vpop.f32.mrf.mxu0
  %v988 = vadd.f32 %v859, %v987
  %v989 = vpop.f32.mrf.mxu0
  %990 = vmatprep.mubr.bf16.mxu0 %v528
  %991 = vmatmul.mubr.bf16.gmra.mxu0 %v527
  %v992 = vpop.f32.mrf.mxu0
  %v993 = vadd.f32 %v864, %v992
  %v994 = vpop.f32.mrf.mxu0
  %v995 = vpop.f32.mrf.mxu0
  %v996 = vadd.f32 %v867, %v995
  %v997 = vpop.f32.mrf.mxu0
  %998 = vmatprep.mubr.bf16.mxu0 %v536
  %999 = vmatmul.mubr.bf16.gmra.mxu0 %v535
  %v1000 = vpop.f32.mrf.mxu0
  %v1001 = vadd.f32 %v872, %v1000
  %v1002 = vpop.f32.mrf.mxu0
  %v1003 = vpop.f32.mrf.mxu0
  %v1004 = vadd.f32 %v875, %v1003
  %v1005 = vpop.f32.mrf.mxu0
  %1006 = vmatprep.mubr.bf16.mxu0 %v544
  %1007 = vmatmul.mubr.bf16.gmra.mxu0 %v543
  %v1008 = vpop.f32.mrf.mxu0
  %v1009 = vadd.f32 %v880, %v1008
  %v1010 = vpop.f32.mrf.mxu0
  %v1011 = vpop.f32.mrf.mxu0
  %v1012 = vadd.f32 %v883, %v1011
  %v1013 = vpop.f32.mrf.mxu0
  %1014 = vmatprep.mubr.bf16.mxu0 %v552
  %1015 = vmatmul.mubr.bf16.gmra.mxu0 %v551
  %v1016 = vpop.f32.mrf.mxu0
  %v1017 = vadd.f32 %v888, %v1016
  %v1018 = vpop.f32.mrf.mxu0
  %v1019 = vpop.f32.mrf.mxu0
  %v1020 = vadd.f32 %v891, %v1019
  %v1021 = vpop.f32.mrf.mxu0
  %1022 = vmatprep.mubr.bf16.mxu0 %v560
  %1023 = vmatmul.mubr.bf16.gmra.mxu0 %v559
  %v1024 = vpop.f32.mrf.mxu0
  %v1025 = vadd.f32 %v896, %v1024
  %v1026 = vpop.f32.mrf.mxu0
  %v1027 = vpop.f32.mrf.mxu0
  %v1028 = vadd.f32 %v899, %v1027
  %v1029 = vpop.f32.mrf.mxu0
  %1030 = vmatprep.mubr.bf16.mxu0 %v568
  %1031 = vmatmul.mubr.bf16.gmra.mxu0 %v567
  %v1032 = vpop.f32.mrf.mxu0
  %v1033 = vadd.f32 %v904, %v1032
  %v1034 = vpop.f32.mrf.mxu0
  %v1035 = vpop.f32.mrf.mxu0
  %v1036 = vadd.f32 %v907, %v1035
  %v1037 = vpop.f32.mrf.mxu0
  %1038 = vdwg.mxu0
  %1039 = vmatprep.subr.mxu0 0.0
  %1040 = vmatpush1.msra.mxu0 %v242
  %1041 = vmatprep.subr.mxu0 0.0
  %1042 = vmatpush1.msra.mxu0 %v241
  %1043 = vmatprep.subr.mxu0 0.0
  %1044 = vmatpush1.msra.mxu0 %v240
  %1045 = vmatprep.subr.mxu0 0.0
  %1046 = vmatpush1.msra.mxu0 %v239
  %1047 = vmatprep.subr.mxu0 0.0
  %1048 = vmatpush1.msra.mxu0 %v238
  %1049 = vmatprep.subr.mxu0 0.0
  %1050 = vmatpush1.msra.mxu0 %v237
  %1051 = vmatprep.subr.mxu0 0.0
  %1052 = vmatpush1.msra.mxu0 %v236
  %1053 = vmatprep.subr.mxu0 0.0
  %1054 = vmatpush1.msra.mxu0 %v235
  %1055 = vmatprep.subr.mxu0 0.0
  %1056 = vmatpush1.msra.mxu0 %v234
  %1057 = vmatprep.subr.mxu0 0.0
  %1058 = vmatpush1.msra.mxu0 %v233
  %1059 = vmatprep.subr.mxu0 0.0
  %1060 = vmatpush1.msra.mxu0 %v232
  %1061 = vmatprep.subr.mxu0 0.0
  %1062 = vmatpush1.msra.mxu0 %v231
  %1063 = vmatprep.subr.mxu0 0.0
  %1064 = vmatpush1.msra.mxu0 %v230
  %1065 = vmatprep.subr.mxu0 0.0
  %1066 = vmatpush1.msra.mxu0 %v229
  %1067 = vmatprep.subr.mxu0 0.0
  %1068 = vmatpush1.msra.mxu0 %v228
  %1069 = vmatprep.subr.mxu0 0.0
  %1070 = vmatpush1.msra.mxu0 %v227
  %1071 = vmatprep.subr.mxu0 0.0
  %1072 = vmatpush2.msra.mxu0 0.0
  %1073 = vmatprep.subr.mxu0 0.0
  %1074 = vmatpush2.msra.mxu0 0.0
  %1075 = vmatprep.subr.mxu0 0.0
  %1076 = vmatpush2.msra.mxu0 0.0
  %1077 = vmatprep.subr.mxu0 0.0
  %1078 = vmatpush2.msra.mxu0 0.0
  %1079 = vmatprep.subr.mxu0 0.0
  %1080 = vmatpush2.msra.mxu0 0.0
  %1081 = vmatprep.subr.mxu0 0.0
  %1082 = vmatpush2.msra.mxu0 0.0
  %1083 = vmatprep.subr.mxu0 0.0
  %1084 = vmatpush2.msra.mxu0 0.0
  %1085 = vmatprep.subr.mxu0 0.0
  %1086 = vmatpush2.msra.mxu0 0.0
  %1087 = vmatprep.subr.mxu0 0.0
  %1088 = vmatpush2.msra.mxu0 %v250
  %1089 = vmatprep.subr.mxu0 0.0
  %1090 = vmatpush2.msra.mxu0 %v249
  %1091 = vmatprep.subr.mxu0 0.0
  %1092 = vmatpush2.msra.mxu0 %v248
  %1093 = vmatprep.subr.mxu0 0.0
  %1094 = vmatpush2.msra.mxu0 %v247
  %1095 = vmatprep.subr.mxu0 0.0
  %1096 = vmatpush2.msra.mxu0 %v246
  %1097 = vmatprep.subr.mxu0 0.0
  %1098 = vmatpush2.msra.mxu0 %v245
  %1099 = vmatprep.subr.mxu0 0.0
  %1100 = vmatpush2.msra.mxu0 %v244
  %1101 = vmatprep.subr.mxu0 0.0
  %1102 = vmatpush2.msra.mxu0 %v243
  %1103 = vmatprep.mubr.bf16.mxu0 %v629
  %1104 = vmatmul.mubr.bf16.gmra.mxu0 %v513
  %v1105 = vpop.f32.mrf.mxu0
  %v1106 = vadd.f32 %v977, %v1105
  %v1107 = vpop.f32.mrf.mxu0
  %v1108 = vpop.f32.mrf.mxu0
  %v1109 = vadd.f32 %v980, %v1108
  %v1110 = vpop.f32.mrf.mxu0
  %1111 = vmatprep.mubr.bf16.mxu0 %v632
  %1112 = vmatmul.mubr.bf16.gmra.mxu0 %v521
  %v1113 = vpop.f32.mrf.mxu0
  %v1114 = vadd.f32 %v985, %v1113
  %v1115 = vpop.f32.mrf.mxu0
  %v1116 = vpop.f32.mrf.mxu0
  %v1117 = vadd.f32 %v988, %v1116
  %v1118 = vpop.f32.mrf.mxu0
  %1119 = vmatprep.mubr.bf16.mxu0 %v635
  %1120 = vmatmul.mubr.bf16.gmra.mxu0 %v529
  %v1121 = vpop.f32.mrf.mxu0
  %v1122 = vadd.f32 %v993, %v1121
  %v1123 = vpop.f32.mrf.mxu0
  %v1124 = vpop.f32.mrf.mxu0
  %v1125 = vadd.f32 %v996, %v1124
  %v1126 = vpop.f32.mrf.mxu0
  %1127 = vmatprep.mubr.bf16.mxu0 %v638
  %1128 = vmatmul.mubr.bf16.gmra.mxu0 %v537
  %v1129 = vpop.f32.mrf.mxu0
  %v1130 = vadd.f32 %v1001, %v1129
  %v1131 = vpop.f32.mrf.mxu0
  %v1132 = vpop.f32.mrf.mxu0
  %v1133 = vadd.f32 %v1004, %v1132
  %v1134 = vpop.f32.mrf.mxu0
  %1135 = vmatprep.mubr.bf16.mxu0 %v641
  %1136 = vmatmul.mubr.bf16.gmra.mxu0 %v545
  %v1137 = vpop.f32.mrf.mxu0
  %v1138 = vadd.f32 %v1009, %v1137
  %v1139 = vpop.f32.mrf.mxu0
  %v1140 = vpop.f32.mrf.mxu0
  %v1141 = vadd.f32 %v1012, %v1140
  %v1142 = vpop.f32.mrf.mxu0
  %1143 = vmatprep.mubr.bf16.mxu0 %v644
  %1144 = vmatmul.mubr.bf16.gmra.mxu0 %v553
  %v1145 = vpop.f32.mrf.mxu0
  %v1146 = vadd.f32 %v1017, %v1145
  %v1147 = vpop.f32.mrf.mxu0
  %v1148 = vpop.f32.mrf.mxu0
  %v1149 = vadd.f32 %v1020, %v1148
  %v1150 = vpop.f32.mrf.mxu0
  %1151 = vmatprep.mubr.bf16.mxu0 %v647
  %1152 = vmatmul.mubr.bf16.gmra.mxu0 %v561
  %v1153 = vpop.f32.mrf.mxu0
  %v1154 = vadd.f32 %v1025, %v1153
  %v1155 = vpop.f32.mrf.mxu0
  %v1156 = vpop.f32.mrf.mxu0
  %v1157 = vadd.f32 %v1028, %v1156
  %v1158 = vpop.f32.mrf.mxu0
  %1159 = vmatprep.mubr.bf16.mxu0 %v650
  %1160 = vmatmul.mubr.bf16.gmra.mxu0 %v569
  %v1161 = vpop.f32.mrf.mxu0
  %v1162 = vadd.f32 %v1033, %v1161
  %v1163 = vpop.f32.mrf.mxu0
  %v1164 = vpop.f32.mrf.mxu0
  %v1165 = vadd.f32 %v1036, %v1164
  %v1166 = vpop.f32.mrf.mxu0
  %1167 = vdwg.mxu0
  %vm1168 = vcmask 400384
  %1169 = vst.msk [vmem:[%s2] sm:$0xff] %vm1168, %v1106
  %1170 = vst.msk [vmem:[%s2 + $0x8] sm:$0xff] %vm1168, %v1109
  %1171 = vst.msk [vmem:[%s2 + $0x10] sm:$0xff] %vm1168, %v1114
  %1172 = vst.msk [vmem:[%s2 + $0x18] sm:$0xff] %vm1168, %v1117
  %1173 = vst.msk [vmem:[%s2 + $0x20] sm:$0xff] %vm1168, %v1122
  %1174 = vst.msk [vmem:[%s2 + $0x28] sm:$0xff] %vm1168, %v1125
  %1175 = vst.msk [vmem:[%s2 + $0x30] sm:$0xff] %vm1168, %v1130
  %1176 = vst.msk [vmem:[%s2 + $0x38] sm:$0xff] %vm1168, %v1133
  %1177 = vst.msk [vmem:[%s2 + $0x40] sm:$0xff] %vm1168, %v1138
  %1178 = vst.msk [vmem:[%s2 + $0x48] sm:$0xff] %vm1168, %v1141
  %1179 = vst.msk [vmem:[%s2 + $0x50] sm:$0xff] %vm1168, %v1146
  %1180 = vst.msk [vmem:[%s2 + $0x58] sm:$0xff] %vm1168, %v1149
  %1181 = vst.msk [vmem:[%s2 + $0x60] sm:$0xff] %vm1168, %v1154
  %1182 = vst.msk [vmem:[%s2 + $0x68] sm:$0xff] %vm1168, %v1157
  %1183 = vst.msk [vmem:[%s2 + $0x70] sm:$0xff] %vm1168, %v1162
  %1184 = vst.msk [vmem:[%s2 + $0x78] sm:$0xff] %vm1168, %v1165
  // Predicated region
  $region10: #{tpu_custom_call.1} parent=0 // pred_check
    _
  $region11: #{tpu_custom_call.1} parent=0 // pred_check_branch
    %1186 = sbr.rel (0) target = $region13
  $region12: #{tpu_custom_call.1} parent=0 // pred_region
    _
  $region13: #{tpu_custom_call.1} parent=0 // pred_fallthru
    _
  // Predicated region
  $region14: #{tpu_custom_call.1} parent=0 // pred_check
    _
  $region15: #{tpu_custom_call.1} parent=0 // pred_check_branch
    %1188 = sbr.rel (0) target = $region17
  $region16: #{tpu_custom_call.1} parent=0 // pred_region
    _
  $region17: #{tpu_custom_call.1} parent=0 // pred_fallthru
    _

</llo_original>
